<compile_context>
chip_gen: v5e
topology: v5e:2x2
jax: 0.10.0
libtpu: 0.0.40
codegen_flags: <defaults>
</compile_context>

<pallas_src>
import jax
import jax.numpy as jnp
import numpy as np
from jax import lax
from jax.experimental import pallas as pl
from jax.experimental.pallas import tpu as pltpu

_LANES = 128
_SUBLANES = 8


def _round_up(x, m):
    return ((x + m - 1) // m) * m


def _choose_tm(m_rows):
    """Deep-M row tile, but keep >=2 grid steps so the 'parallel' grid axis
    can be sharded across both v7x TensorCores."""
    for tm in (512, 256, 128, 64, 32, 16, 8):
        if m_rows >= 2 * tm:
            return tm
    return _SUBLANES


def _dwsep_matmul_kernel(lhs_ref, w_ref, o_ref):
    """Pure MXU matmul: (TM, Kp) bf16 x (Kp, Cout_pad) bf16 -> (TM, Cout_pad) f32."""
    o_ref[...] = jnp.dot(lhs_ref[...], w_ref[...],
                         preferred_element_type=jnp.float32).astype(o_ref.dtype)


def depthwise_separable_conv2d(x_nchw, w_depthwise, w_pointwise, *,
                               stride=1, padding=0):
    """x_nchw: (N, Cin, H, W); w_depthwise: (Cin, 1, K, K) [PyTorch layout];
    w_pointwise: (Cout, Cin, 1, 1) [PyTorch layout].  Returns (N, Cout, Ho, Wo)."""
    N, Cin, H, W = x_nchw.shape
    K = w_depthwise.shape[-1]
    Cout = w_pointwise.shape[0]
    Ho = (H + 2 * padding - K) // stride + 1
    Wo = (W + 2 * padding - K) // stride + 1

    rows = N * Ho * Wo                       # matmul M dim (batch folded in)
    kdim = K * K * Cin                       # contraction dim
    kdim_pad = _round_up(kdim, _LANES)       # lane-dense contraction (36 -> 128)
    cout_pad = _round_up(Cout, _LANES)       # lane-dense output columns
    tm = _choose_tm(rows)
    rows_pad = _round_up(rows, tm)           # multiple of TM (and of 8 sublanes)
    grid_m = rows_pad // tm

    # ---- wrapper glue: layout, padding, im2col (plain JAX, fused by XLA) ----
    x_nhwc = jnp.transpose(x_nchw, (0, 2, 3, 1))                       # (N,H,W,Cin)
    x_pad = jnp.pad(x_nhwc, ((0, 0), (padding, padding),
                             (padding, padding), (0, 0)))
    # im2col in (kh, kw, c) order -> rows of length K*K*Cin.
    cols = []
    for kh in range(K):
        for kw in range(K):
            cols.append(x_pad[:, kh:kh + (Ho - 1) * stride + 1:stride,
                              kw:kw + (Wo - 1) * stride + 1:stride, :])
    patches = jnp.concatenate(cols, axis=-1)                           # (N,Ho,Wo,K*K*Cin)
    lhs = patches.reshape(rows, kdim)
    lhs = jnp.pad(lhs, ((0, rows_pad - rows), (0, kdim_pad - kdim)))
    lhs = lhs.astype(jnp.bfloat16)                                     # bf16 MXU inputs

    # ---- fused rank-factored weight, padded lane-dense on both axes ----
    wdw = w_depthwise[:, 0, :, :].astype(jnp.float32)                  # (Cin, K, K)
    wpw = w_pointwise[:, :, 0, 0].astype(jnp.float32)                  # (Cout, Cin)
    # fused[(kh,kw,c), co] = wdw[c, kh, kw] * wpw[co, c]  (matches im2col order)
    fused = jnp.einsum('ckl,oc->klco', wdw, wpw).reshape(kdim, Cout)
    fused = jnp.pad(fused, ((0, kdim_pad - kdim), (0, cout_pad - Cout)))
    fused = fused.astype(jnp.bfloat16)

    out = pl.pallas_call(
        _dwsep_matmul_kernel,
        out_shape=jax.ShapeDtypeStruct((rows_pad, cout_pad), jnp.float32),
        grid_spec=pltpu.PrefetchScalarGridSpec(
            num_scalar_prefetch=0,
            grid=(grid_m,),
            in_specs=[
                pl.BlockSpec((tm, kdim_pad), lambda m: (m, 0)),
                # constant block index -> weight tile stays resident, no re-DMA
                pl.BlockSpec((kdim_pad, cout_pad), lambda m: (0, 0)),
            ],
            out_specs=pl.BlockSpec((tm, cout_pad), lambda m: (m, 0)),
        ),
        compiler_params=pltpu.CompilerParams(
            dimension_semantics=("parallel",),
            vmem_limit_bytes=32 * 1024 * 1024,
        ),
    )(lhs, fused)

    # Epilogue: slice the real data FIRST (rows, Cout), then the cheap
    # NHWC -> NCHW transpose runs only over the small un-padded tensor.
    out = out[:rows, :Cout].reshape(N, Ho, Wo, Cout)
    return jnp.transpose(out, (0, 3, 1, 2))


def _reference(x_nchw, w_depthwise, w_pointwise, *, stride, padding):
    """Pure-JAX reference using lax.conv_general_dilated (matches PyTorch)."""
    Cin = x_nchw.shape[1]
    dw = lax.conv_general_dilated(
        x_nchw, w_depthwise, window_strides=(stride, stride),
        padding=((padding, padding), (padding, padding)),
        dimension_numbers=("NCHW", "OIHW", "NCHW"),
        feature_group_count=Cin)
    pw = lax.conv_general_dilated(
        dw, w_pointwise, window_strides=(1, 1), padding="VALID",
        dimension_numbers=("NCHW", "OIHW", "NCHW"))
    return pw


if __name__ == "__main__":
    # Module config: in_channels=4, out_channels=8, kernel_size=3, stride=1,
    # padding=1, bias=False.
    N, Cin, H, W = 2, 4, 16, 16
    Cout, K, stride, padding = 8, 3, 1, 1

    key = jax.random.PRNGKey(0)
    kx, kd, kp = jax.random.split(key, 3)
    x = jax.random.normal(kx, (N, Cin, H, W), jnp.float32)
    # PyTorch parameter shapes: depthwise (Cin,1,K,K), pointwise (Cout,Cin,1,1).
    w_dw = jax.random.normal(kd, (Cin, 1, K, K), jnp.float32) * 0.2
    w_pw = jax.random.normal(kp, (Cout, Cin, 1, 1), jnp.float32) * 0.2

    out = depthwise_separable_conv2d(x, w_dw, w_pw, stride=stride, padding=padding)
    out = jax.block_until_ready(out)

    ref = _reference(x, w_dw, w_pw, stride=stride, padding=padding)
    # bf16 MXU inputs (f32 accumulate) -> loosened tolerance per review.
    np.testing.assert_allclose(np.asarray(out), np.asarray(ref), atol=2e-2, rtol=2e-2)

    print("KERNEL_OK")
</pallas_src>

<mosaic_0001>
module attributes {stable_mosaic.version = 11 : i64} {
  func.func @_dwsep_matmul_kernel(%arg0: i32, %arg1: memref<256x128xbf16, #tpu.memory_space<vmem>>, %arg2: memref<128x128xbf16, #tpu.memory_space<vmem>>, %arg3: memref<256x128xf32, #tpu.memory_space<vmem>>) attributes {dimension_semantics = [#tpu.dimension_semantics<parallel>], iteration_bounds = array<i64: 2>, scalar_prefetch = 0 : i64, scratch_operands = 0 : i64, tpu.core_type = #tpu.core_type<tc>, window_params = [{transform_indices = @transform_0, window_bounds = array<i64: 256, 128>}, {pipeline_mode = #tpu.pipeline_mode<synchronous>, transform_indices = @transform_1, window_bounds = array<i64: 128, 128>}, {transform_indices = @transform_2, window_bounds = array<i64: 256, 128>}]} {
    %c0 = arith.constant 0 : index
    %c0_0 = arith.constant 0 : index
    %0 = vector.load %arg1[%c0, %c0_0] : memref<256x128xbf16, #tpu.memory_space<vmem>>, vector<256x128xbf16>
    %c0_1 = arith.constant 0 : index
    %c0_2 = arith.constant 0 : index
    %1 = vector.load %arg2[%c0_1, %c0_2] : memref<128x128xbf16, #tpu.memory_space<vmem>>, vector<128x128xbf16>
    %cst = arith.constant dense<0.000000e+00> : vector<256x128xf32>
    %2 = tpu.matmul %0, %1, %cst {dimension_numbers = #tpu.dot_dimension_numbers<[1], [0], [0], [1], [0, 0, 1, 1], [], []>} : vector<256x128xbf16>, vector<128x128xbf16>, vector<256x128xf32> -> vector<256x128xf32>
    %c0_3 = arith.constant 0 : index
    %c0_4 = arith.constant 0 : index
    %3 = vector.load %arg3[%c0_3, %c0_4] : memref<256x128xf32, #tpu.memory_space<vmem>>, vector<256x128xf32>
    tpu.vector_store %arg3[%c0_3, %c0_4], %2 {strides = array<i32>} : memref<256x128xf32, #tpu.memory_space<vmem>>, vector<256x128xf32>,
    return
  }
  func.func @transform_0(%arg0: i32) -> (i32, i32) {
    %c0_i32 = arith.constant 0 : i32
    %c0_i32_0 = arith.constant 0 : i32
    return %arg0, %c0_i32 : i32, i32
  }
  func.func @transform_1(%arg0: i32) -> (i32, i32) {
    %c0_i32 = arith.constant 0 : i32
    %c0_i32_0 = arith.constant 0 : i32
    %c0_i32_1 = arith.constant 0 : i32
    return %c0_i32, %c0_i32_0 : i32, i32
  }
  func.func @transform_2(%arg0: i32) -> (i32, i32) {
    %c0_i32 = arith.constant 0 : i32
    %c0_i32_0 = arith.constant 0 : i32
    return %arg0, %c0_i32 : i32, i32
  }
}

</mosaic_0001>

<llo_original>
// kernel: tpu_custom_call.1
$region0: #{tpu_custom_call.1}
  #allocation0 [shape = 'u32[]', space=smem, size = 0x4, offset = 0x4, fixed_abs, tag = 'smem constant byte address 0x4 - core index']
  #allocation1 [shape = 'u32[72,128]{1,0:T(1,128)}', space=vmem, size = 0x9000, scoped, tag = 'internal scratch']
  %s0 = inlined_call_operand.hbm [shape: bf16[512,128], index: 0, kind: input, shape index: {}]
  %s1 = inlined_call_operand.hbm [shape: bf16[128,128], index: 1, kind: input, shape index: {}]
  %s2 = inlined_call_operand.hbm [shape: f32[512,128], index: 2, kind: output, shape index: {}]
  %s3 = sld [smem:[#allocation0]]
  $region49: #{tpu_custom_call.1} parent=0
    _
  %s5 = ssub.s32 1, %s3
  %s6 = scalar_select 0, %s5, %s3
  $region1: #{tpu_custom_call.1} parent=0
    #allocation2 [shape = 'u8[131072]{0}', space=vmem, size = 0x20000, scoped, tag = 'input window, operand 0']
    #allocation3 [shape = 's32[2]{0}', space=sflag, size = 0x8, scoped, tag = 'scoped memory for tpu_custom_call.1']
    #allocation4 [shape = 's32[2]{0}', space=sflag, size = 0x8, scoped, tag = 'scoped memory for tpu_custom_call.1']
    #allocation5 [shape = 'u8[32768]{0}', space=vmem, size = 0x8000, scoped, tag = 'input window, operand 1, single buffered']
    #allocation6 [shape = 's32[1]{0}', space=sflag, size = 0x4, scoped, tag = 'scoped memory for tpu_custom_call.1']
    #allocation7 [shape = 'u8[262144]{0}', space=vmem, size = 0x40000, scoped, tag = 'output window, operand 0']
    %7 = vsyncpa [#allocation3], 0
    %s8 = scalar_lea.sflag [#allocation3], 1
    %9 = vsyncpa %s8, 0
    %10 = vsyncpa [#allocation6], 0
    %11 = vsyncpa [#allocation4], 0
    %s12 = scalar_lea.sflag [#allocation4], 1
    %13 = vsyncpa %s12, 0
    loop: start=0, step=1, limit=4
    $region2: #{tpu_custom_call.1} parent=1 // loop_pre_header
      _
    $region3: #{tpu_custom_call.1} parent=1 // loop_header
      %s15 = sphi 0, %s19
      %p16 = scmp.ge.s32.totalorder %s15, 4
      %s25 = sphi 0, %s27
      %s28 = sphi 0, %s25
      %s29 = sphi 0, %s28
      %s45 = sphi 0, %s29
      %s49 = sphi 0, %s49
      %s51 = sphi 0, %s49
      %s52 = sphi 0, %s51
      %s66 = sphi 0, %s52
      %s72 = sphi 0, %s74
      %s75 = sphi 0, %s72
      %s76 = sphi 0, %s75
      %s92 = sphi 0, %s76
    $region4: #{tpu_custom_call.1} parent=1 // loop_header_branch
      %18 = sbr.rel (%p16) target = $region8
    $region5: #{tpu_custom_call.1} parent=1 // loop_body
      %s20 = ssub.s32 %s15, 1
      %s21 = ssub.s32 %s15, 2
      %s22 = sadd.s32 %s15, 1
      %s23 = ssub.s32 %s15, %s22
      %p24 = scmp.eq.s32.totalorder %s23, 0
      %s26 = sadd.s32 %s25, 1
      %s27 = scalar_select %p24, %s25, %s26
      %p30 = pneg %p24
      %p31 = scmp.eq.s32.totalorder %s15, 1
      %p32 = por %p30, %p31
      %p33 = scmp.ne.s32.totalorder %s25, %s28
      %p34 = scmp.eq.s32.totalorder %s15, 0
      %p35 = por %p33, %p34
      %p36 = scmp.ne.s32.totalorder %s25, %s28
      %p37 = scmp.eq.s32.totalorder %s20, 1
      %p38 = por %p36, %p37
      %p39 = scmp.ne.s32.totalorder %s28, %s29
      %p40 = scmp.eq.s32.totalorder %s20, 0
      %p41 = por %p39, %p40
      %p42 = scmp.ne.s32.totalorder %s28, %s29
      %p43 = scmp.eq.s32.totalorder %s21, 1
      %p44 = por %p42, %p43
      %p46 = scmp.ne.s32.totalorder %s29, %s45
      %p47 = scmp.eq.s32.totalorder %s21, 0
      %p48 = por %p46, %p47
      %s50 = sadd.s32 %s49, 1
      %p53 = scmp.eq.s32.totalorder %s15, 1
      %p54 = scmp.ne.s32.totalorder %s49, %s51
      %p55 = scmp.eq.s32.totalorder %s15, 0
      %p56 = por %p54, %p55
      %p57 = scmp.ne.s32.totalorder %s49, %s51
      %p58 = scmp.eq.s32.totalorder %s20, 1
      %p59 = por %p57, %p58
      %p60 = scmp.ne.s32.totalorder %s51, %s52
      %p61 = scmp.eq.s32.totalorder %s20, 0
      %p62 = por %p60, %p61
      %p63 = scmp.ne.s32.totalorder %s51, %s52
      %p64 = scmp.eq.s32.totalorder %s21, 1
      %p65 = por %p63, %p64
      %p67 = scmp.ne.s32.totalorder %s52, %s66
      %p68 = scmp.eq.s32.totalorder %s21, 0
      %p69 = por %p67, %p68
      %s70 = ssub.s32 %s15, %s22
      %p71 = scmp.eq.s32.totalorder %s70, 0
      %s73 = sadd.s32 %s72, 1
      %s74 = scalar_select %p71, %s72, %s73
      %p77 = pneg %p71
      %p78 = scmp.eq.s32.totalorder %s15, 1
      %p79 = por %p77, %p78
      %p80 = scmp.ne.s32.totalorder %s72, %s75
      %p81 = scmp.eq.s32.totalorder %s15, 0
      %p82 = por %p80, %p81
      %p83 = scmp.ne.s32.totalorder %s72, %s75
      %p84 = scmp.eq.s32.totalorder %s20, 1
      %p85 = por %p83, %p84
      %p86 = scmp.ne.s32.totalorder %s75, %s76
      %p87 = scmp.eq.s32.totalorder %s20, 0
      %p88 = por %p86, %p87
      %p89 = scmp.ne.s32.totalorder %s75, %s76
      %p90 = scmp.eq.s32.totalorder %s21, 1
      %p91 = por %p89, %p90
      %p93 = scmp.ne.s32.totalorder %s76, %s92
      %p94 = scmp.eq.s32.totalorder %s21, 0
      %p95 = por %p93, %p94
      %p96 = scmp.le.s32.totalorder 1, %s15
      %p97 = scmp.lt.s32.totalorder %s15, 3
      %p98 = pnand %p96, %p97
      %p99 = pneg %p98
      // Predicated region
      $region9: #{tpu_custom_call.1} parent=5 // pred_check
        _
      $region10: #{tpu_custom_call.1} parent=5 // pred_check_branch
        %101 = sbr.rel (%p98) target = $region12
      $region11: #{tpu_custom_call.1} parent=5 // pred_region
        %s102 = ssub.s32 %s15, 1
        // Predicated region
        $region13: #{tpu_custom_call.1} parent=11 // pred_check
          %p103 = pneg %p62
        $region14: #{tpu_custom_call.1} parent=11 // pred_check_branch
          %105 = sbr.rel (%p103) target = $region16
        $region15: #{tpu_custom_call.1} parent=11 // pred_region
          %107 = vsyncadd [#allocation6], 0
          %s108 = sshll.u32 %s1, 4
          %s109 = int_to_ptr.hbm [resolvable:$true] %s108
          %s110 = sshll.u32 [#allocation5], 4
          %s111 = int_to_ptr.vmem [resolvable:$true] %s110
          %116 = dma.hbm_to_vmem [thread:$0]  %s109, 1024, %s111, [#allocation6], 64, 64, 4
        $region16: #{tpu_custom_call.1} parent=11 // pred_fallthru
          _
      $region12: #{tpu_custom_call.1} parent=5 // pred_fallthru
        _
      %p117 = scmp.lt.s32.totalorder %s15, 2
      // Predicated region
      $region17: #{tpu_custom_call.1} parent=5 // pred_check
        %p118 = pneg %p117
      $region18: #{tpu_custom_call.1} parent=5 // pred_check_branch
        %120 = sbr.rel (%p118) target = $region20
      $region19: #{tpu_custom_call.1} parent=5 // pred_region
        // Predicated region
        $region21: #{tpu_custom_call.1} parent=19 // pred_check
          %p121 = pneg %p35
        $region22: #{tpu_custom_call.1} parent=19 // pred_check_branch
          %123 = sbr.rel (%p121) target = $region24
        $region23: #{tpu_custom_call.1} parent=19 // pred_region
          %s124 = sand.u32 %s25, 1
          %s125 = scalar_lea.sflag [#allocation3], %s124
          %s126 = sand.u32 %s25, 1
          %s127 = smul.addr %s126, 128
          %s128 = scalar_lea.vmem [#allocation2], %s127
          %s129 = smul.u32 32, %s15
          %131 = vsyncadd %s125, 0
          %s132 = smul.addr %s129, 4
          %s133 = scalar_lea.hbm %s0, %s132
          %s134 = sshll.u32 %s133, 4
          %s135 = int_to_ptr.hbm [resolvable:$true] %s134
          %s136 = sshll.u32 %s128, 4
          %s137 = int_to_ptr.vmem [resolvable:$true] %s136
          %142 = dma.hbm_to_vmem [thread:$0]  %s135, 2048, %s137, %s125, 64, 64, 4
        $region24: #{tpu_custom_call.1} parent=19 // pred_fallthru
          _
      $region20: #{tpu_custom_call.1} parent=5 // pred_fallthru
        _
      %p143 = scmp.le.s32.totalorder 1, %s15
      %p144 = scmp.lt.s32.totalorder %s15, 3
      %p145 = pnand %p143, %p144
      %p146 = pneg %p145
      // Predicated region
      $region25: #{tpu_custom_call.1} parent=5 // pred_check
        _
      $region26: #{tpu_custom_call.1} parent=5 // pred_check_branch
        %148 = sbr.rel (%p145) target = $region28
      $region27: #{tpu_custom_call.1} parent=5 // pred_region
        %s149 = ssub.s32 %s15, 1
        %s150 = sand.u32 %s28, 1
        %s151 = scalar_lea.sflag [#allocation3], %s150
        %s152 = sand.u32 %s28, 1
        %s153 = smul.addr %s152, 128
        %s154 = scalar_lea.vmem [#allocation2], %s153
        // Predicated region
        $region29: #{tpu_custom_call.1} parent=27 // pred_check
          %p155 = pneg %p41
        $region30: #{tpu_custom_call.1} parent=27 // pred_check_branch
          %157 = sbr.rel (%p155) target = $region32
        $region31: #{tpu_custom_call.1} parent=27 // pred_region
          %159 = dma.done %s151, 2048
        $region32: #{tpu_custom_call.1} parent=27 // pred_fallthru
          _
        // Predicated region
        $region33: #{tpu_custom_call.1} parent=27 // pred_check
          %p160 = pneg %p62
        $region34: #{tpu_custom_call.1} parent=27 // pred_check_branch
          %162 = sbr.rel (%p160) target = $region36
        $region35: #{tpu_custom_call.1} parent=27 // pred_region
          %164 = dma.done [#allocation6], 1024
        $region36: #{tpu_custom_call.1} parent=27 // pred_fallthru
          _
        %s165 = sand.u32 %s28, 1
        %s166 = scalar_lea.sflag [#allocation3], %s165
        %s167 = sand.u32 %s28, 1
        %s168 = smul.addr %s167, 128
        %s169 = scalar_lea.vmem [#allocation2], %s168
        %p170 = pneg %p41
        %p171 = pneg %p38
        %p172 = pneg %p62
        %p173 = pneg %p59
        %p174 = pneg %p88
        %p175 = pneg %p85
        %s176 = sand.u32 %s75, 1
        %s177 = scalar_lea.sflag [#allocation4], %s176
        %s178 = sand.u32 %s75, 1
        %s179 = smul.addr %s178, 256
        %s180 = scalar_lea.vmem [#allocation7], %s179
        %s181 = smul.u32 32, %s20
        %s182 = smul.u32 32, %s20
        %v183 = vld [vmem:[%s154] sm:$0xf]
        %v184 = vld [vmem:[%s154 + $0x4] sm:$0xf]
        %v185 = vld [vmem:[%s154 + $0x8] sm:$0xf]
        %v186 = vld [vmem:[%s154 + $0xc] sm:$0xf]
        %v187 = vld [vmem:[%s154 + $0x10] sm:$0xf]
        %v188 = vld [vmem:[%s154 + $0x14] sm:$0xf]
        %v189 = vld [vmem:[%s154 + $0x18] sm:$0xf]
        %v190 = vld [vmem:[%s154 + $0x1c] sm:$0xf]
        %v191 = vld [vmem:[%s154 + $0x20] sm:$0xf]
        %v192 = vld [vmem:[%s154 + $0x24] sm:$0xf]
        %v193 = vld [vmem:[%s154 + $0x28] sm:$0xf]
        %v194 = vld [vmem:[%s154 + $0x2c] sm:$0xf]
        %v195 = vld [vmem:[%s154 + $0x30] sm:$0xf]
        %v196 = vld [vmem:[%s154 + $0x34] sm:$0xf]
        %v197 = vld [vmem:[%s154 + $0x38] sm:$0xf]
        %v198 = vld [vmem:[%s154 + $0x3c] sm:$0xf]
        %v199 = vld [vmem:[%s154 + $0x40] sm:$0xf]
        %v200 = vld [vmem:[%s154 + $0x44] sm:$0xf]
        %v201 = vld [vmem:[%s154 + $0x48] sm:$0xf]
        %v202 = vld [vmem:[%s154 + $0x4c] sm:$0xf]
        %v203 = vld [vmem:[%s154 + $0x50] sm:$0xf]
        %v204 = vld [vmem:[%s154 + $0x54] sm:$0xf]
        %v205 = vld [vmem:[%s154 + $0x58] sm:$0xf]
        %v206 = vld [vmem:[%s154 + $0x5c] sm:$0xf]
        %v207 = vld [vmem:[%s154 + $0x60] sm:$0xf]
        %v208 = vld [vmem:[%s154 + $0x64] sm:$0xf]
        %v209 = vld [vmem:[%s154 + $0x68] sm:$0xf]
        %v210 = vld [vmem:[%s154 + $0x6c] sm:$0xf]
        %v211 = vld [vmem:[%s154 + $0x70] sm:$0xf]
        %v212 = vld [vmem:[%s154 + $0x74] sm:$0xf]
        %v213 = vld [vmem:[%s154 + $0x78] sm:$0xf]
        %v214 = vld [vmem:[%s154 + $0x7c] sm:$0xf]
        %v215 = vld [vmem:[#allocation5] sm:$0xf]
        %v216 = vld [vmem:[#allocation5 + $0x4] sm:$0xf]
        %v217 = vld [vmem:[#allocation5 + $0x8] sm:$0xf]
        %v218 = vld [vmem:[#allocation5 + $0xc] sm:$0xf]
        %v219 = vld [vmem:[#allocation5 + $0x10] sm:$0xf]
        %v220 = vld [vmem:[#allocation5 + $0x14] sm:$0xf]
        %v221 = vld [vmem:[#allocation5 + $0x18] sm:$0xf]
        %v222 = vld [vmem:[#allocation5 + $0x1c] sm:$0xf]
        %v223 = vld [vmem:[#allocation5 + $0x20] sm:$0xf]
        %v224 = vld [vmem:[#allocation5 + $0x24] sm:$0xf]
        %v225 = vld [vmem:[#allocation5 + $0x28] sm:$0xf]
        %v226 = vld [vmem:[#allocation5 + $0x2c] sm:$0xf]
        %v227 = vld [vmem:[#allocation5 + $0x30] sm:$0xf]
        %v228 = vld [vmem:[#allocation5 + $0x34] sm:$0xf]
        %v229 = vld [vmem:[#allocation5 + $0x38] sm:$0xf]
        %v230 = vld [vmem:[#allocation5 + $0x3c] sm:$0xf]
        %v263 = vunpack.c.l.b16 %v183
        %v264 = vunpack.c.l.b16 %v184
        %v265 = vunpack.c.l.b16 %v185
        %v266 = vunpack.c.l.b16 %v186
        %v267 = vunpack.c.l.b16 %v187
        %v268 = vunpack.c.l.b16 %v188
        %v269 = vunpack.c.l.b16 %v189
        %v270 = vunpack.c.l.b16 %v190
        %v271 = vunpack.c.l.b16 %v191
        %v272 = vunpack.c.l.b16 %v192
        %v273 = vunpack.c.l.b16 %v193
        %v274 = vunpack.c.l.b16 %v194
        %v275 = vunpack.c.l.b16 %v195
        %v276 = vunpack.c.l.b16 %v196
        %v277 = vunpack.c.l.b16 %v197
        %v278 = vunpack.c.l.b16 %v198
        %v279 = vunpack.c.l.b16 %v199
        %v280 = vunpack.c.l.b16 %v200
        %v281 = vunpack.c.l.b16 %v201
        %v282 = vunpack.c.l.b16 %v202
        %v283 = vunpack.c.l.b16 %v203
        %v284 = vunpack.c.l.b16 %v204
        %v285 = vunpack.c.l.b16 %v205
        %v286 = vunpack.c.l.b16 %v206
        %v287 = vunpack.c.l.b16 %v207
        %v288 = vunpack.c.l.b16 %v208
        %v289 = vunpack.c.l.b16 %v209
        %v290 = vunpack.c.l.b16 %v210
        %v291 = vunpack.c.l.b16 %v211
        %v292 = vunpack.c.l.b16 %v212
        %v293 = vunpack.c.l.b16 %v213
        %v294 = vunpack.c.l.b16 %v214
        %v295 = vpack.c.b16 %v264, %v263
        %v296 = vpack.c.b16 %v266, %v265
        %v297 = vpack.c.b16 %v268, %v267
        %v298 = vpack.c.b16 %v270, %v269
        %v299 = vpack.c.b16 %v272, %v271
        %v300 = vpack.c.b16 %v274, %v273
        %v301 = vpack.c.b16 %v276, %v275
        %v302 = vpack.c.b16 %v278, %v277
        %v303 = vpack.c.b16 %v280, %v279
        %v304 = vpack.c.b16 %v282, %v281
        %v305 = vpack.c.b16 %v284, %v283
        %v306 = vpack.c.b16 %v286, %v285
        %v307 = vpack.c.b16 %v288, %v287
        %v308 = vpack.c.b16 %v290, %v289
        %v309 = vpack.c.b16 %v292, %v291
        %v310 = vpack.c.b16 %v294, %v293
        %v343 = vunpack.c.l.b16 %v215
        %v344 = vunpack.c.l.b16 %v216
        %v345 = vunpack.c.l.b16 %v217
        %v346 = vunpack.c.l.b16 %v218
        %v347 = vunpack.c.l.b16 %v219
        %v348 = vunpack.c.l.b16 %v220
        %v349 = vunpack.c.l.b16 %v221
        %v350 = vunpack.c.l.b16 %v222
        %v351 = vunpack.c.l.b16 %v223
        %v352 = vunpack.c.l.b16 %v224
        %v353 = vunpack.c.l.b16 %v225
        %v354 = vunpack.c.l.b16 %v226
        %v355 = vunpack.c.l.b16 %v227
        %v356 = vunpack.c.l.b16 %v228
        %v357 = vunpack.c.l.b16 %v229
        %v358 = vunpack.c.l.b16 %v230
        %v359 = vpack.c.b16 %v344, %v343
        %v360 = vpack.c.b16 %v346, %v345
        %v361 = vpack.c.b16 %v348, %v347
        %v362 = vpack.c.b16 %v350, %v349
        %v363 = vpack.c.b16 %v352, %v351
        %v364 = vpack.c.b16 %v354, %v353
        %v365 = vpack.c.b16 %v356, %v355
        %v366 = vpack.c.b16 %v358, %v357
        %375 = vmatpush.bf16.msra.mxu0 %v366
        %376 = vmatpush.bf16.msra.mxu0 %v365
        %377 = vmatpush.bf16.msra.mxu0 %v364
        %378 = vmatpush.bf16.msra.mxu0 %v363
        %379 = vmatpush.bf16.msra.mxu0 %v362
        %380 = vmatpush.bf16.msra.mxu0 %v361
        %381 = vmatpush.bf16.msra.mxu0 %v360
        %382 = vmatpush.bf16.msra.mxu0 %v359
        %383 = vmatmul.bf16.gmra.mxu0 %v295
        %v384 = vpop.f32.mrf.mxu0
        %v385 = vadd.f32 0.0, %v384
        %v386 = vpop.f32.mrf.mxu0
        %v387 = vadd.f32 0.0, %v386
        %388 = vmatmul.bf16.gmra.mxu0 %v296
        %v389 = vpop.f32.mrf.mxu0
        %v390 = vadd.f32 0.0, %v389
        %v391 = vpop.f32.mrf.mxu0
        %v392 = vadd.f32 0.0, %v391
        %393 = vmatmul.bf16.gmra.mxu0 %v297
        %v394 = vpop.f32.mrf.mxu0
        %v395 = vadd.f32 0.0, %v394
        %v396 = vpop.f32.mrf.mxu0
        %v397 = vadd.f32 0.0, %v396
        %398 = vmatmul.bf16.gmra.mxu0 %v298
        %v399 = vpop.f32.mrf.mxu0
        %v400 = vadd.f32 0.0, %v399
        %v401 = vpop.f32.mrf.mxu0
        %v402 = vadd.f32 0.0, %v401
        %403 = vmatmul.bf16.gmra.mxu0 %v299
        %v404 = vpop.f32.mrf.mxu0
        %v405 = vadd.f32 0.0, %v404
        %v406 = vpop.f32.mrf.mxu0
        %v407 = vadd.f32 0.0, %v406
        %408 = vmatmul.bf16.gmra.mxu0 %v300
        %v409 = vpop.f32.mrf.mxu0
        %v410 = vadd.f32 0.0, %v409
        %v411 = vpop.f32.mrf.mxu0
        %v412 = vadd.f32 0.0, %v411
        %413 = vmatmul.bf16.gmra.mxu0 %v301
        %v414 = vpop.f32.mrf.mxu0
        %v415 = vadd.f32 0.0, %v414
        %v416 = vpop.f32.mrf.mxu0
        %v417 = vadd.f32 0.0, %v416
        %418 = vmatmul.bf16.gmra.mxu0 %v302
        %v419 = vpop.f32.mrf.mxu0
        %v420 = vadd.f32 0.0, %v419
        %v421 = vpop.f32.mrf.mxu0
        %v422 = vadd.f32 0.0, %v421
        %423 = vmatmul.bf16.gmra.mxu0 %v303
        %v424 = vpop.f32.mrf.mxu0
        %v425 = vadd.f32 0.0, %v424
        %v426 = vpop.f32.mrf.mxu0
        %v427 = vadd.f32 0.0, %v426
        %428 = vmatmul.bf16.gmra.mxu0 %v304
        %v429 = vpop.f32.mrf.mxu0
        %v430 = vadd.f32 0.0, %v429
        %v431 = vpop.f32.mrf.mxu0
        %v432 = vadd.f32 0.0, %v431
        %433 = vmatmul.bf16.gmra.mxu0 %v305
        %v434 = vpop.f32.mrf.mxu0
        %v435 = vadd.f32 0.0, %v434
        %v436 = vpop.f32.mrf.mxu0
        %v437 = vadd.f32 0.0, %v436
        %438 = vmatmul.bf16.gmra.mxu0 %v306
        %v439 = vpop.f32.mrf.mxu0
        %v440 = vadd.f32 0.0, %v439
        %v441 = vpop.f32.mrf.mxu0
        %v442 = vadd.f32 0.0, %v441
        %443 = vmatmul.bf16.gmra.mxu0 %v307
        %v444 = vpop.f32.mrf.mxu0
        %v445 = vadd.f32 0.0, %v444
        %v446 = vpop.f32.mrf.mxu0
        %v447 = vadd.f32 0.0, %v446
        %448 = vmatmul.bf16.gmra.mxu0 %v308
        %v449 = vpop.f32.mrf.mxu0
        %v450 = vadd.f32 0.0, %v449
        %v451 = vpop.f32.mrf.mxu0
        %v452 = vadd.f32 0.0, %v451
        %453 = vmatmul.bf16.gmra.mxu0 %v309
        %v454 = vpop.f32.mrf.mxu0
        %v455 = vadd.f32 0.0, %v454
        %v456 = vpop.f32.mrf.mxu0
        %v457 = vadd.f32 0.0, %v456
        %458 = vmatmul.bf16.gmra.mxu0 %v310
        %v459 = vpop.f32.mrf.mxu0
        %v460 = vadd.f32 0.0, %v459
        %v461 = vpop.f32.mrf.mxu0
        %v462 = vadd.f32 0.0, %v461
        %463 = vdwg.mxu0
        %464 = vst [vmem:[%s180] sm:$0xff] %v385
        %465 = vst [vmem:[%s180 + $0x8] sm:$0xff] %v387
        %466 = vst [vmem:[%s180 + $0x10] sm:$0xff] %v390
        %467 = vst [vmem:[%s180 + $0x18] sm:$0xff] %v392
        %468 = vst [vmem:[%s180 + $0x20] sm:$0xff] %v395
        %469 = vst [vmem:[%s180 + $0x28] sm:$0xff] %v397
        %470 = vst [vmem:[%s180 + $0x30] sm:$0xff] %v400
        %471 = vst [vmem:[%s180 + $0x38] sm:$0xff] %v402
        %472 = vst [vmem:[%s180 + $0x40] sm:$0xff] %v405
        %473 = vst [vmem:[%s180 + $0x48] sm:$0xff] %v407
        %474 = vst [vmem:[%s180 + $0x50] sm:$0xff] %v410
        %475 = vst [vmem:[%s180 + $0x58] sm:$0xff] %v412
        %476 = vst [vmem:[%s180 + $0x60] sm:$0xff] %v415
        %477 = vst [vmem:[%s180 + $0x68] sm:$0xff] %v417
        %478 = vst [vmem:[%s180 + $0x70] sm:$0xff] %v420
        %479 = vst [vmem:[%s180 + $0x78] sm:$0xff] %v422
        %480 = vst [vmem:[%s180 + $0x80] sm:$0xff] %v425
        %481 = vst [vmem:[%s180 + $0x88] sm:$0xff] %v427
        %482 = vst [vmem:[%s180 + $0x90] sm:$0xff] %v430
        %483 = vst [vmem:[%s180 + $0x98] sm:$0xff] %v432
        %484 = vst [vmem:[%s180 + $0xa0] sm:$0xff] %v435
        %485 = vst [vmem:[%s180 + $0xa8] sm:$0xff] %v437
        %486 = vst [vmem:[%s180 + $0xb0] sm:$0xff] %v440
        %487 = vst [vmem:[%s180 + $0xb8] sm:$0xff] %v442
        %488 = vst [vmem:[%s180 + $0xc0] sm:$0xff] %v445
        %489 = vst [vmem:[%s180 + $0xc8] sm:$0xff] %v447
        %490 = vst [vmem:[%s180 + $0xd0] sm:$0xff] %v450
        %491 = vst [vmem:[%s180 + $0xd8] sm:$0xff] %v452
        %492 = vst [vmem:[%s180 + $0xe0] sm:$0xff] %v455
        %493 = vst [vmem:[%s180 + $0xe8] sm:$0xff] %v457
        %494 = vst [vmem:[%s180 + $0xf0] sm:$0xff] %v460
        %495 = vst [vmem:[%s180 + $0xf8] sm:$0xff] %v462
        %s496 = sand.u32 %s75, 1
        %s497 = scalar_lea.sflag [#allocation4], %s496
        %s498 = sand.u32 %s75, 1
        %s499 = smul.addr %s498, 256
        %s500 = scalar_lea.vmem [#allocation7], %s499
        // Predicated region
        $region37: #{tpu_custom_call.1} parent=27 // pred_check
          %p501 = pneg %p85
        $region38: #{tpu_custom_call.1} parent=27 // pred_check_branch
          %503 = sbr.rel (%p501) target = $region40
        $region39: #{tpu_custom_call.1} parent=27 // pred_region
          %s504 = smul.u32 32, %s20
          %506 = vsyncadd %s497, 0
          %s507 = smul.addr %s504, 8
          %s508 = scalar_lea.hbm %s2, %s507
          %s509 = sshll.u32 %s500, 4
          %s510 = int_to_ptr.vmem [resolvable:$true] %s509
          %s511 = sshll.u32 %s508, 4
          %s512 = int_to_ptr.hbm [resolvable:$true] %s511
          %517 = dma.vmem_to_hbm [thread:$0]  %s510, 4096, %s512, %s497, 128, 128, 8
        $region40: #{tpu_custom_call.1} parent=27 // pred_fallthru
          _
      $region28: #{tpu_custom_call.1} parent=5 // pred_fallthru
        _
      %p518 = scmp.le.s32.totalorder 2, %s15
      // Predicated region
      $region41: #{tpu_custom_call.1} parent=5 // pred_check
        %p519 = pneg %p518
      $region42: #{tpu_custom_call.1} parent=5 // pred_check_branch
        %521 = sbr.rel (%p519) target = $region44
      $region43: #{tpu_custom_call.1} parent=5 // pred_region
        %s522 = ssub.s32 %s15, 2
        // Predicated region
        $region45: #{tpu_custom_call.1} parent=43 // pred_check
          %p523 = pneg %p91
        $region46: #{tpu_custom_call.1} parent=43 // pred_check_branch
          %525 = sbr.rel (%p523) target = $region48
        $region47: #{tpu_custom_call.1} parent=43 // pred_region
          %s526 = sand.u32 %s76, 1
          %s527 = scalar_lea.sflag [#allocation4], %s526
          %s528 = sand.u32 %s76, 1
          %s529 = smul.addr %s528, 256
          %s530 = scalar_lea.vmem [#allocation7], %s529
          %532 = dma.done %s527, 4096
        $region48: #{tpu_custom_call.1} parent=43 // pred_fallthru
          _
      $region44: #{tpu_custom_call.1} parent=5 // pred_fallthru
        _
    $region6: #{tpu_custom_call.1} parent=1 // loop_footer
      %s19 = sadd.s32 1, %s15
    $region7: #{tpu_custom_call.1} parent=1 // loop_footer_branch
      %14 = sbr.rel target = $region3
    $region8: #{tpu_custom_call.1} parent=1 // loop_exit
      _
    %533 = vsyncpa [#allocation3], 1
    %s534 = scalar_lea.sflag [#allocation3], 1
    %535 = vsyncpa %s534, 1
    %536 = vsyncpa [#allocation6], 1
    %537 = vsyncpa [#allocation4], 1
    %s538 = scalar_lea.sflag [#allocation4], 1
    %539 = vsyncpa %s538, 1

</llo_original>
